<compile_context>
chip_gen: v7x
topology: tpu7x:2x2x1
jax: 0.10.0
libtpu: 0.0.40
codegen_flags: <defaults>
</compile_context>

<pallas_src>
import functools

import jax
import jax.numpy as jnp
from jax import lax
from jax.experimental import pallas as pl
from jax.experimental.pallas import tpu as pltpu

EPS = 1e-6
_VMEM_LIMIT = 32 * 1024 * 1024  # explicit scoped-VMEM cap; safe on v5e/v6e/v7x


def _pick_s_tile(C, S, target_bytes=2 * 1024 * 1024):
    """Largest multiple-of-128 spatial tile that divides S and keeps one
    (C, TS) f32 block under ~target_bytes.  Falls back to the full extent."""
    if S % 128 != 0:
        return S
    max_ts = max(128, (target_bytes // max(C * 4, 1)) // 128 * 128)
    ts = min(S, max_ts)
    while S % ts != 0:
        ts -= 128
    return ts


def _stats_kernel(x_ref, mu_ref, sig_ref, s1_acc, s2_acc, *, n, eps):
    """Per-channel mean / (unbiased) std over the spatial axis of one batch
    element, accumulated across spatial tiles (grid axis 1)."""
    s = pl.program_id(1)

    @pl.when(s == 0)
    def _():
        s1_acc[...] = jnp.zeros_like(s1_acc)
        s2_acc[...] = jnp.zeros_like(s2_acc)

    x = x_ref[0].astype(jnp.float32)                       # (C, TS), f32 accum
    s1_acc[...] += jnp.sum(x, axis=-1, keepdims=True)      # (C, 1)
    s2_acc[...] += jnp.sum(x * x, axis=-1, keepdims=True)  # (C, 1)

    @pl.when(s == pl.num_programs(1) - 1)
    def _():
        s1 = s1_acc[...]
        s2 = s2_acc[...]
        mu = s1 * (1.0 / n)
        # Unbiased variance (torch.var default); guard n == 1 and one-pass
        # cancellation (clamp at 0).
        var = (s2 - s1 * mu) * (1.0 / max(n - 1.0, 1.0))
        var = jnp.maximum(var, 0.0)
        mu_ref[0] = mu
        sig_ref[0] = jnp.sqrt(var + eps)


def _apply_kernel(perm_ref, lmda_ref, x_ref, mu_ref, sig_ref, mu2_ref,
                  sig2_ref, o_ref):
    """Elementwise MixStyle apply for one (batch, spatial-tile) block.

    perm_ref, lmda_ref : scalar-prefetch SMEM refs, (B,) int32 / (B,) float32
    x_ref  : (1, C, TS) input tile of batch element b
    mu/sig : (1, C, 1) own statistics (block b)
    mu2/sig2 : (1, C, 1) permuted statistics (block perm[b], gathered via
               scalar-prefetched index_map -- no full permuted tile is loaded)
    """
    b = pl.program_id(0)
    lmda = lmda_ref[b]

    mu = mu_ref[0]      # (C, 1) f32
    sig = sig_ref[0]
    mu2 = mu2_ref[0]
    sig2 = sig2_ref[0]

    mu_mix = mu * lmda + mu2 * (1.0 - lmda)
    sig_mix = sig * lmda + sig2 * (1.0 - lmda)

    # Fold normalization + re-styling into one per-channel affine:
    #   (x - mu)/sig * sig_mix + mu_mix  ==  x * a + bias
    # Divide only touches C-length vectors (exact divide kept for accuracy).
    a = sig_mix / sig
    bias = mu_mix - mu * a

    o_ref[0] = (x_ref[0] * a + bias).astype(o_ref.dtype)


def mixstyle_apply(x5, perm, lmda):
    """Mixed branch of MixStyle.  x5: (B, C, D, H, W); perm: (B,) int32;
    lmda: (B,) float32 (Beta samples)."""
    B, C = x5.shape[0], x5.shape[1]
    S = 1
    for d in x5.shape[2:]:
        S *= d
    x = x5.reshape(B, C, S)
    ts = _pick_s_tile(C, S)
    n_s = S // ts

    # ---- Pass 1: per-(batch, channel) statistics (f32). ----
    mu, sig = pl.pallas_call(
        functools.partial(_stats_kernel, n=float(S), eps=EPS),
        out_shape=(jax.ShapeDtypeStruct((B, C, 1), jnp.float32),
                   jax.ShapeDtypeStruct((B, C, 1), jnp.float32)),
        grid_spec=pltpu.PrefetchScalarGridSpec(
            num_scalar_prefetch=0,
            grid=(B, n_s),
            in_specs=[pl.BlockSpec((1, C, ts), lambda b, s: (b, 0, s))],
            out_specs=(pl.BlockSpec((1, C, 1), lambda b, s: (b, 0, 0)),
                       pl.BlockSpec((1, C, 1), lambda b, s: (b, 0, 0))),
            scratch_shapes=[pltpu.VMEM((C, 1), jnp.float32),
                            pltpu.VMEM((C, 1), jnp.float32)],
        ),
        compiler_params=pltpu.CompilerParams(
            dimension_semantics=("parallel", "arbitrary"),
            vmem_limit_bytes=_VMEM_LIMIT,
        ),
    )(x)

    # PyTorch detaches mu/sig before mixing.
    # TODO(synk): a custom VJP would be needed for exact training-time grads
    # through the Pallas apply kernel; forward semantics match.
    mu = lax.stop_gradient(mu)
    sig = lax.stop_gradient(sig)

    # ---- Pass 2: elementwise apply; permuted stats gathered via index_map. ----
    out = pl.pallas_call(
        _apply_kernel,
        out_shape=jax.ShapeDtypeStruct((B, C, S), x.dtype),
        grid_spec=pltpu.PrefetchScalarGridSpec(
            num_scalar_prefetch=2,   # perm (int32), lmda (f32) -> SMEM
            grid=(B, n_s),
            in_specs=[
                pl.BlockSpec((1, C, ts), lambda b, s, perm, lmda: (b, 0, s)),
                pl.BlockSpec((1, C, 1), lambda b, s, perm, lmda: (b, 0, 0)),
                pl.BlockSpec((1, C, 1), lambda b, s, perm, lmda: (b, 0, 0)),
                pl.BlockSpec((1, C, 1), lambda b, s, perm, lmda: (perm[b], 0, 0)),
                pl.BlockSpec((1, C, 1), lambda b, s, perm, lmda: (perm[b], 0, 0)),
            ],
            out_specs=pl.BlockSpec((1, C, ts),
                                   lambda b, s, perm, lmda: (b, 0, s)),
        ),
        compiler_params=pltpu.CompilerParams(
            dimension_semantics=("parallel", "parallel"),
            vmem_limit_bytes=_VMEM_LIMIT,
        ),
    )(perm, lmda, x, mu, sig, mu, sig)

    return out.reshape(x5.shape)


def mixstyle_forward(x, key, p=0.5, alpha=0.1, training=True, activated=True):
    """Full MixStyle forward matching the PyTorch module semantics."""
    if not training or not activated:
        return x
    B = x.shape[0]
    k_coin, k_beta, k_perm = jax.random.split(key, 3)

    coin = jax.random.uniform(k_coin, ())                        # random.random()
    lmda = jax.random.beta(k_beta, alpha, alpha, shape=(B,)).astype(jnp.float32)
    perm = jax.random.permutation(k_perm, B).astype(jnp.int32)   # torch.randperm

    # "if random.random() > p: return x" -> lax.cond skips the kernels entirely
    # on the no-mix branch (instead of computing and discarding with where).
    return lax.cond(coin <= p,
                    lambda xx: mixstyle_apply(xx, perm, lmda),
                    lambda xx: xx,
                    x)


def _mixstyle_ref(x, perm, lmda, eps=EPS):
    """Pure-JAX reference of the mixed branch (for correctness check)."""
    mu = x.mean(axis=(2, 3, 4), keepdims=True)
    var = x.var(axis=(2, 3, 4), keepdims=True, ddof=1)
    sig = jnp.sqrt(var + eps)
    x_normed = (x - mu) / sig
    l = lmda.reshape(-1, 1, 1, 1, 1)
    mu2, sig2 = mu[perm], sig[perm]
    mu_mix = mu * l + mu2 * (1.0 - l)
    sig_mix = sig * l + sig2 * (1.0 - l)
    return x_normed * sig_mix + mu_mix


if __name__ == "__main__":
    # MixStyle has no learned parameters (p, alpha, eps are hyperparameters).
    B, C, D, H, W = 2, 8, 4, 8, 8   # C multiple of 8 keeps f32 vregs fully used
    key = jax.random.PRNGKey(0)
    k_x, k_fwd = jax.random.split(key)
    x = jax.random.normal(k_x, (B, C, D, H, W), dtype=jnp.float32)

    # Deterministic randomness for the stochastic pieces (coin, Beta, perm).
    k_coin, k_beta, k_perm = jax.random.split(k_fwd, 3)
    lmda = jax.random.beta(k_beta, 0.1, 0.1, shape=(B,)).astype(jnp.float32)
    perm = jax.random.permutation(k_perm, B).astype(jnp.int32)

    # Run the Pallas kernels (mixed branch) and verify against pure-JAX ref.
    out = jax.block_until_ready(mixstyle_apply(x, perm, lmda))
    ref = _mixstyle_ref(x, perm, lmda)
    assert out.shape == x.shape and out.dtype == x.dtype
    assert jnp.allclose(out, ref, atol=1e-4, rtol=1e-4), "mismatch vs reference"

    # Exercise the full forward (including the lax.cond-gated skip) once too.
    full = jax.block_until_ready(mixstyle_forward(x, k_fwd, p=0.5, alpha=0.1))
    assert full.shape == x.shape

    print("KERNEL_OK")
</pallas_src>

<mosaic_0001>
module attributes {stable_mosaic.version = 11 : i64} {
  func.func @_stats_kernel(%arg0: i32, %arg1: i32, %arg2: memref<1x8x256xf32, #tpu.memory_space<vmem>>, %arg3: memref<1x8x1xf32, #tpu.memory_space<vmem>>, %arg4: memref<1x8x1xf32, #tpu.memory_space<vmem>>, %arg5: memref<8x1xf32, #tpu.memory_space<vmem>>, %arg6: memref<8x1xf32, #tpu.memory_space<vmem>>) attributes {dimension_semantics = [#tpu.dimension_semantics<parallel>, #tpu.dimension_semantics<arbitrary>], iteration_bounds = array<i64: 2, 1>, scalar_prefetch = 0 : i64, scratch_operands = 2 : i64, tpu.core_type = #tpu.core_type<tc>, window_params = [{transform_indices = @transform_0, window_bounds = array<i64: 1, 8, 256>}, {transform_indices = @transform_1, window_bounds = array<i64: 1, 8, 1>}, {transform_indices = @transform_2, window_bounds = array<i64: 1, 8, 1>}]} {
    %c0_i32 = arith.constant 0 : i32
    %0 = arith.cmpi eq, %arg1, %c0_i32 : i32
    %1 = arith.extui %0 : i1 to i32
    %c0_i32_0 = arith.constant 0 : i32
    %2 = arith.cmpi ne, %1, %c0_i32_0 : i32
    scf.if %2 {
      %cst_14 = arith.constant 0.000000e+00 : f32
      %19 = vector.broadcast %cst_14 : f32 to vector<8x1xf32>
      %c0_15 = arith.constant 0 : index
      %c0_16 = arith.constant 0 : index
      %20 = vector.load %arg5[%c0_15, %c0_16] : memref<8x1xf32, #tpu.memory_space<vmem>>, vector<8x1xf32>
      tpu.vector_store %arg5[%c0_15, %c0_16], %19 {strides = array<i32>} : memref<8x1xf32, #tpu.memory_space<vmem>>, vector<8x1xf32>,
      %cst_17 = arith.constant 0.000000e+00 : f32
      %21 = vector.broadcast %cst_17 : f32 to vector<8x1xf32>
      %c0_18 = arith.constant 0 : index
      %c0_19 = arith.constant 0 : index
      %22 = vector.load %arg6[%c0_18, %c0_19] : memref<8x1xf32, #tpu.memory_space<vmem>>, vector<8x1xf32>
      tpu.vector_store %arg6[%c0_18, %c0_19], %21 {strides = array<i32>} : memref<8x1xf32, #tpu.memory_space<vmem>>, vector<8x1xf32>,
    } else {
    }
    %c0 = arith.constant 0 : index
    %c0_1 = arith.constant 0 : index
    %c0_2 = arith.constant 0 : index
    %3 = vector.load %arg2[%c0, %c0_1, %c0_2] : memref<1x8x256xf32, #tpu.memory_space<vmem>>, vector<1x8x256xf32>
    %4 = vector.shape_cast %3 : vector<1x8x256xf32> to vector<8x256xf32>
    %c0_3 = arith.constant 0 : index
    %c0_4 = arith.constant 0 : index
    %5 = vector.load %arg5[%c0_3, %c0_4] : memref<8x1xf32, #tpu.memory_space<vmem>>, vector<8x1xf32>
    %cst = arith.constant dense<0.000000e+00> : vector<8xf32>
    %6 = vector.multi_reduction <add>, %4, %cst [1] : vector<8x256xf32> to vector<8xf32>
    %7 = vector.shape_cast %6 : vector<8xf32> to vector<8x1xf32>
    %8 = arith.addf %5, %7 : vector<8x1xf32>
    %c0_5 = arith.constant 0 : index
    %c0_6 = arith.constant 0 : index
    %9 = vector.load %arg5[%c0_5, %c0_6] : memref<8x1xf32, #tpu.memory_space<vmem>>, vector<8x1xf32>
    tpu.vector_store %arg5[%c0_5, %c0_6], %8 {strides = array<i32>} : memref<8x1xf32, #tpu.memory_space<vmem>>, vector<8x1xf32>,
    %c0_7 = arith.constant 0 : index
    %c0_8 = arith.constant 0 : index
    %10 = vector.load %arg6[%c0_7, %c0_8] : memref<8x1xf32, #tpu.memory_space<vmem>>, vector<8x1xf32>
    %11 = arith.mulf %4, %4 : vector<8x256xf32>
    %cst_9 = arith.constant dense<0.000000e+00> : vector<8xf32>
    %12 = vector.multi_reduction <add>, %11, %cst_9 [1] : vector<8x256xf32> to vector<8xf32>
    %13 = vector.shape_cast %12 : vector<8xf32> to vector<8x1xf32>
    %14 = arith.addf %10, %13 : vector<8x1xf32>
    %c0_10 = arith.constant 0 : index
    %c0_11 = arith.constant 0 : index
    %15 = vector.load %arg6[%c0_10, %c0_11] : memref<8x1xf32, #tpu.memory_space<vmem>>, vector<8x1xf32>
    tpu.vector_store %arg6[%c0_10, %c0_11], %14 {strides = array<i32>} : memref<8x1xf32, #tpu.memory_space<vmem>>, vector<8x1xf32>,
    %c0_i32_12 = arith.constant 0 : i32
    %16 = arith.cmpi eq, %arg1, %c0_i32_12 : i32
    %17 = arith.extui %16 : i1 to i32
    %c0_i32_13 = arith.constant 0 : i32
    %18 = arith.cmpi ne, %17, %c0_i32_13 : i32
    scf.if %18 {
      %c0_14 = arith.constant 0 : index
      %c0_15 = arith.constant 0 : index
      %19 = vector.load %arg5[%c0_14, %c0_15] : memref<8x1xf32, #tpu.memory_space<vmem>>, vector<8x1xf32>
      %c0_16 = arith.constant 0 : index
      %c0_17 = arith.constant 0 : index
      %20 = vector.load %arg6[%c0_16, %c0_17] : memref<8x1xf32, #tpu.memory_space<vmem>>, vector<8x1xf32>
      %cst_18 = arith.constant 3.906250e-03 : f32
      %21 = vector.broadcast %cst_18 : f32 to vector<8x1xf32>
      %22 = arith.mulf %19, %21 : vector<8x1xf32>
      %23 = arith.mulf %19, %22 : vector<8x1xf32>
      %24 = arith.subf %20, %23 : vector<8x1xf32>
      %cst_19 = arith.constant 0.00392156886 : f32
      %25 = vector.broadcast %cst_19 : f32 to vector<8x1xf32>
      %26 = arith.mulf %24, %25 : vector<8x1xf32>
      %cst_20 = arith.constant 0.000000e+00 : f32
      %27 = vector.broadcast %cst_20 : f32 to vector<8x1xf32>
      %28 = arith.maximumf %26, %27 : vector<8x1xf32>
      %c0_21 = arith.constant 0 : index
      %c0_22 = arith.constant 0 : index
      %c0_23 = arith.constant 0 : index
      %29 = vector.load %arg3[%c0_21, %c0_22, %c0_23] : memref<1x8x1xf32, #tpu.memory_space<vmem>>, vector<1x8x1xf32>
      %30 = vector.shape_cast %29 : vector<1x8x1xf32> to vector<8x1xf32>
      %31 = vector.shape_cast %22 : vector<8x1xf32> to vector<1x8x1xf32>
      tpu.vector_store %arg3[%c0_21, %c0_22, %c0_23], %31 {strides = array<i32>} : memref<1x8x1xf32, #tpu.memory_space<vmem>>, vector<1x8x1xf32>,
      %cst_24 = arith.constant 9.99999997E-7 : f32
      %32 = vector.broadcast %cst_24 : f32 to vector<8x1xf32>
      %33 = arith.addf %28, %32 : vector<8x1xf32>
      %34 = math.sqrt %33 : vector<8x1xf32>
      %c0_25 = arith.constant 0 : index
      %c0_26 = arith.constant 0 : index
      %c0_27 = arith.constant 0 : index
      %35 = vector.load %arg4[%c0_25, %c0_26, %c0_27] : memref<1x8x1xf32, #tpu.memory_space<vmem>>, vector<1x8x1xf32>
      %36 = vector.shape_cast %35 : vector<1x8x1xf32> to vector<8x1xf32>
      %37 = vector.shape_cast %34 : vector<8x1xf32> to vector<1x8x1xf32>
      tpu.vector_store %arg4[%c0_25, %c0_26, %c0_27], %37 {strides = array<i32>} : memref<1x8x1xf32, #tpu.memory_space<vmem>>, vector<1x8x1xf32>,
    } else {
    }
    return
  }
  func.func @transform_0(%arg0: i32, %arg1: i32) -> (i32, i32, i32) {
    %c0_i32 = arith.constant 0 : i32
    %c0_i32_0 = arith.constant 0 : i32
    return %arg0, %c0_i32, %arg1 : i32, i32, i32
  }
  func.func @transform_1(%arg0: i32, %arg1: i32) -> (i32, i32, i32) {
    %c0_i32 = arith.constant 0 : i32
    %c0_i32_0 = arith.constant 0 : i32
    %c0_i32_1 = arith.constant 0 : i32
    return %arg0, %c0_i32, %c0_i32_0 : i32, i32, i32
  }
  func.func @transform_2(%arg0: i32, %arg1: i32) -> (i32, i32, i32) {
    %c0_i32 = arith.constant 0 : i32
    %c0_i32_0 = arith.constant 0 : i32
    %c0_i32_1 = arith.constant 0 : i32
    return %arg0, %c0_i32, %c0_i32_0 : i32, i32, i32
  }
}

</mosaic_0001>

<llo_original>
// kernel: tpu_custom_call.1
$region0: #{tpu_custom_call.1}
  #allocation0 [shape = 'u32[]', space=smem, size = 0x4, offset = 0x4, fixed_abs, tag = 'smem constant byte address 0x4 - core index']
  #allocation1 [shape = 'u32[144,128]{1,0:T(1,128)}', space=vmem, size = 0x12000, scoped, tag = 'internal scratch']
  #allocation2 [shape = 'f32[8,1]{1,0:T(8,128)}', space=vmem, size = 0x1000, scoped, tag = 'scratch operand']
  #allocation3 [shape = 'f32[8,1]{1,0:T(8,128)}', space=vmem, size = 0x1000, scoped, tag = 'scratch operand']
  %s0 = inlined_call_operand.hbm [shape: f32[2,8,256], index: 0, kind: input, shape index: {}]
  %s1 = inlined_call_operand.vmem [shape: f32[2,8,1], index: 1, kind: output, shape index: {0}]
  %s2 = inlined_call_operand.vmem [shape: f32[2,8,1], index: 2, kind: output, shape index: {1}]
  %3 = xla_tuple %s1, %s2
  %s4 = sld [smem:[#allocation0]]
  $region57: #{tpu_custom_call.1} parent=0
    _
  %s6 = ssub.s32 1, %s4
  %s7 = scalar_select 0, %s6, %s4
  $region1: #{tpu_custom_call.1} parent=0
    #allocation4 [shape = 'u8[16384]{0}', space=vmem, size = 0x4000, scoped, tag = 'input window, operand 0']
    #allocation5 [shape = 's32[2]{0}', space=sflag, size = 0x8, scoped, tag = 'scoped memory for tpu_custom_call.1']
    %8 = vsyncpa [#allocation5], 0
    %s9 = scalar_lea.sflag [#allocation5], 1
    %10 = vsyncpa %s9, 0
    loop: start=0, step=1, limit=4
    $region2: #{tpu_custom_call.1} parent=1 // loop_pre_header
      _
    $region3: #{tpu_custom_call.1} parent=1 // loop_header
      %s12 = sphi 0, %s16
      %p13 = scmp.ge.s32.totalorder %s12, 4
      %s19 = sphi 0, %s31
      %s20 = sphi 0, %s27
      %s21 = sphi 0, %s19
      %s22 = sphi 0, %s20
      %s23 = sphi 0, %s21
      %s24 = sphi 0, %s22
      %s36 = sphi 0, %s38
      %s39 = sphi 0, %s36
      %s40 = sphi 0, %s39
      %s56 = sphi 0, %s40
      %s62 = sphi 0, %s64
      %s65 = sphi 0, %s62
      %s66 = sphi 0, %s65
      %s82 = sphi 0, %s66
      %s88 = sphi 0, %s90
      %s91 = sphi 0, %s88
      %s92 = sphi 0, %s91
      %s108 = sphi 0, %s92
    $region4: #{tpu_custom_call.1} parent=1 // loop_header_branch
      %15 = sbr.rel (%p13) target = $region8
    $region5: #{tpu_custom_call.1} parent=1 // loop_body
      %s17 = ssub.s32 %s12, 1
      %s18 = ssub.s32 %s12, 2
      %s25 = sadd.s32 1, %s20
      %p26 = scmp.ge.s32.totalorder %s25, 1
      %s27 = scalar_select %p26, 0, %s25
      %s28 = sadd.s32 1, %s19
      %s29 = scalar_select %p26, %s28, %s19
      %p30 = scmp.ge.s32.totalorder %s29, 2
      %s31 = scalar_select %p30, 0, %s29
      %s32 = ssub.s32 %s19, %s31
      %s33 = ssub.s32 %s20, %s27
      %s34 = sor.u32 %s32, %s33
      %p35 = scmp.eq.s32.totalorder %s34, 0
      %s37 = sadd.s32 %s36, 1
      %s38 = scalar_select %p35, %s36, %s37
      %p41 = pneg %p35
      %p42 = scmp.eq.s32.totalorder %s12, 1
      %p43 = por %p41, %p42
      %p44 = scmp.ne.s32.totalorder %s36, %s39
      %p45 = scmp.eq.s32.totalorder %s12, 0
      %p46 = por %p44, %p45
      %p47 = scmp.ne.s32.totalorder %s36, %s39
      %p48 = scmp.eq.s32.totalorder %s17, 1
      %p49 = por %p47, %p48
      %p50 = scmp.ne.s32.totalorder %s39, %s40
      %p51 = scmp.eq.s32.totalorder %s17, 0
      %p52 = por %p50, %p51
      %p53 = scmp.ne.s32.totalorder %s39, %s40
      %p54 = scmp.eq.s32.totalorder %s18, 1
      %p55 = por %p53, %p54
      %p57 = scmp.ne.s32.totalorder %s40, %s56
      %p58 = scmp.eq.s32.totalorder %s18, 0
      %p59 = por %p57, %p58
      %s60 = ssub.s32 %s19, %s31
      %p61 = scmp.eq.s32.totalorder %s60, 0
      %s63 = sadd.s32 %s62, 1
      %s64 = scalar_select %p61, %s62, %s63
      %p67 = pneg %p61
      %p68 = scmp.eq.s32.totalorder %s12, 1
      %p69 = por %p67, %p68
      %p70 = scmp.ne.s32.totalorder %s62, %s65
      %p71 = scmp.eq.s32.totalorder %s12, 0
      %p72 = por %p70, %p71
      %p73 = scmp.ne.s32.totalorder %s62, %s65
      %p74 = scmp.eq.s32.totalorder %s17, 1
      %p75 = por %p73, %p74
      %p76 = scmp.ne.s32.totalorder %s65, %s66
      %p77 = scmp.eq.s32.totalorder %s17, 0
      %p78 = por %p76, %p77
      %p79 = scmp.ne.s32.totalorder %s65, %s66
      %p80 = scmp.eq.s32.totalorder %s18, 1
      %p81 = por %p79, %p80
      %p83 = scmp.ne.s32.totalorder %s66, %s82
      %p84 = scmp.eq.s32.totalorder %s18, 0
      %p85 = por %p83, %p84
      %s86 = ssub.s32 %s19, %s31
      %p87 = scmp.eq.s32.totalorder %s86, 0
      %s89 = sadd.s32 %s88, 1
      %s90 = scalar_select %p87, %s88, %s89
      %p93 = pneg %p87
      %p94 = scmp.eq.s32.totalorder %s12, 1
      %p95 = por %p93, %p94
      %p96 = scmp.ne.s32.totalorder %s88, %s91
      %p97 = scmp.eq.s32.totalorder %s12, 0
      %p98 = por %p96, %p97
      %p99 = scmp.ne.s32.totalorder %s88, %s91
      %p100 = scmp.eq.s32.totalorder %s17, 1
      %p101 = por %p99, %p100
      %p102 = scmp.ne.s32.totalorder %s91, %s92
      %p103 = scmp.eq.s32.totalorder %s17, 0
      %p104 = por %p102, %p103
      %p105 = scmp.ne.s32.totalorder %s91, %s92
      %p106 = scmp.eq.s32.totalorder %s18, 1
      %p107 = por %p105, %p106
      %p109 = scmp.ne.s32.totalorder %s92, %s108
      %p110 = scmp.eq.s32.totalorder %s18, 0
      %p111 = por %p109, %p110
      %p112 = scmp.le.s32.totalorder 1, %s12
      %p113 = scmp.lt.s32.totalorder %s12, 3
      %p114 = pnand %p112, %p113
      %p115 = pneg %p114
      // Predicated region
      $region9: #{tpu_custom_call.1} parent=5 // pred_check
        _
      $region10: #{tpu_custom_call.1} parent=5 // pred_check_branch
        %117 = sbr.rel (%p114) target = $region12
      $region11: #{tpu_custom_call.1} parent=5 // pred_region
        %s118 = ssub.s32 %s12, 1
      $region12: #{tpu_custom_call.1} parent=5 // pred_fallthru
        _
      %p119 = scmp.lt.s32.totalorder %s12, 2
      // Predicated region
      $region13: #{tpu_custom_call.1} parent=5 // pred_check
        %p120 = pneg %p119
      $region14: #{tpu_custom_call.1} parent=5 // pred_check_branch
        %122 = sbr.rel (%p120) target = $region16
      $region15: #{tpu_custom_call.1} parent=5 // pred_region
        // Predicated region
        $region17: #{tpu_custom_call.1} parent=15 // pred_check
          %p123 = pneg %p46
        $region18: #{tpu_custom_call.1} parent=15 // pred_check_branch
          %125 = sbr.rel (%p123) target = $region20
        $region19: #{tpu_custom_call.1} parent=15 // pred_region
          %s126 = sand.u32 %s36, 1
          %s127 = scalar_lea.sflag [#allocation5], %s126
          %s128 = sand.u32 %s36, 1
          %s129 = smul.addr %s128, 16
          %s130 = scalar_lea.vmem [#allocation4], %s129
          %s131 = smul.u32 2, %s20
          %s133 = ssub.s32 256, 256
          %134 = vsyncadd %s127, %s133
          %s135 = smul.addr %s19, 2
          %s136 = sadd.s32 %s131, %s135
          %s137 = smul.addr %s136, 128
          %s138 = scalar_lea.hbm %s0, %s137
          %s140 = sshll.u32 %s130, 4
          %s141 = int_to_ptr.vmem [resolvable:$true] %s140
          %143 = dma.hbm_to_vmem [thread:$0]  %s138, 256, %s141, %s127
        $region20: #{tpu_custom_call.1} parent=15 // pred_fallthru
          _
      $region16: #{tpu_custom_call.1} parent=5 // pred_fallthru
        _
      %p144 = scmp.le.s32.totalorder 1, %s12
      %p145 = scmp.lt.s32.totalorder %s12, 3
      %p146 = pnand %p144, %p145
      %p147 = pneg %p146
      // Predicated region
      $region21: #{tpu_custom_call.1} parent=5 // pred_check
        _
      $region22: #{tpu_custom_call.1} parent=5 // pred_check_branch
        %149 = sbr.rel (%p146) target = $region24
      $region23: #{tpu_custom_call.1} parent=5 // pred_region
        %s150 = ssub.s32 %s12, 1
        %s151 = sand.u32 %s39, 1
        %s152 = scalar_lea.sflag [#allocation5], %s151
        %s153 = sand.u32 %s39, 1
        %s154 = smul.addr %s153, 16
        %s155 = scalar_lea.vmem [#allocation4], %s154
        // Predicated region
        $region25: #{tpu_custom_call.1} parent=23 // pred_check
          %p156 = pneg %p52
        $region26: #{tpu_custom_call.1} parent=23 // pred_check_branch
          %158 = sbr.rel (%p156) target = $region28
        $region27: #{tpu_custom_call.1} parent=23 // pred_region
          %159 = dma.done %s152, 256
        $region28: #{tpu_custom_call.1} parent=23 // pred_fallthru
          _
        %s160 = sand.u32 %s39, 1
        %s161 = scalar_lea.sflag [#allocation5], %s160
        %s162 = sand.u32 %s39, 1
        %s163 = smul.addr %s162, 16
        %s164 = scalar_lea.vmem [#allocation4], %s163
        %p165 = pneg %p52
        %p166 = pneg %p49
        %p167 = pneg %p78
        %p168 = pneg %p75
        %p169 = scmp.lt.s32.totalorder %s21, 1
        %s170 = scalar_select %p169, %s21, 1
        %s171 = smul.addr %s170, 8
        %s172 = scalar_lea.vmem %s1, %s171
        %p173 = pneg %p104
        %p174 = pneg %p101
        %p175 = scmp.lt.s32.totalorder %s21, 1
        %s176 = scalar_select %p175, %s21, 1
        %s177 = smul.addr %s176, 8
        %s178 = scalar_lea.vmem %s2, %s177
        %s179 = smul.u32 2, %s22
        %p180 = scmp.lt.s32.totalorder %s21, 1
        %s181 = scalar_select %p180, %s21, 1
        %s182 = smul.addr %s181, 8
        %s183 = scalar_lea.vmem %s1, %s182
        %p184 = scmp.lt.s32.totalorder %s21, 1
        %s185 = scalar_select %p184, %s21, 1
        %s186 = smul.addr %s185, 8
        %s187 = scalar_lea.vmem %s2, %s186
        %p188 = scmp.eq.s32.totalorder %s22, 0
        // Predicated region
        $region29: #{tpu_custom_call.1} parent=23 // pred_check
          %p189 = pneg %p188
        $region30: #{tpu_custom_call.1} parent=23 // pred_check_branch
          %191 = sbr.rel (%p189) target = $region32
        $region31: #{tpu_custom_call.1} parent=23 // pred_region
          %vm192 = vcmask 7168
          %193 = vst.msk [vmem:[#allocation2] sm:$0xff] %vm192, 0.0
          %194 = vst.msk [vmem:[#allocation3] sm:$0xff] %vm192, 0.0
        $region32: #{tpu_custom_call.1} parent=23 // pred_fallthru
          _
        %v195 = vld [vmem:[%s155] sm:$0xff]
        %v196 = vld [vmem:[%s155 + $0x8] sm:$0xff]
        %v197 = vld [vmem:[#allocation2] sm:$0xff]
        %v198 = vadd.f32 %v195, %v196
        %199 = vadd.xlane.f32.xlu0 %v198
        %v200 = vpop.xlane.xlu0 %199
        %v201 = vadd.f32 %v197, %v200
        %vm202 = vcmask 7168
        %203 = vst.msk [vmem:[#allocation2] sm:$0xff] %vm202, %v201
        %v204 = vld [vmem:[#allocation3] sm:$0xff]
        %v205 = vmul.f32 %v195, %v195
        %v206 = vmul.f32 %v196, %v196
        %v207 = vadd.f32 %v205, %v206
        %208 = vadd.xlane.f32.xlu0 %v207
        %v209 = vpop.xlane.xlu0 %208
        %v210 = vadd.f32 %v204, %v209
        %211 = vst.msk [vmem:[#allocation3] sm:$0xff] %vm202, %v210
        // Predicated region
        $region33: #{tpu_custom_call.1} parent=23 // pred_check
          %p212 = pneg %p188
        $region34: #{tpu_custom_call.1} parent=23 // pred_check_branch
          %214 = sbr.rel (%p212) target = $region36
        $region35: #{tpu_custom_call.1} parent=23 // pred_region
          %v215 = vld [vmem:[#allocation2] sm:$0xff]
          %v216 = vld [vmem:[#allocation3] sm:$0xff]
          %v217 = vmul.f32 %v215, 0.00390625
          %v218 = vmul.f32 %v215, %v217
          %v219 = vsub.f32 %v216, %v218
          %v220 = vmul.f32 %v219, 0.003921569
          %v221 = vmax.f32 %v220, 0.0
          %222 = vst.msk [vmem:[%s183] sm:$0xff] %vm202, %v217
          %v223 = vadd.f32 %v221, 1e-06
          %v224 = vrsqrt.pop %v223
          %v225 = vmul.f32 %v223, %v224
          %vm226 = vcmp.eq.f32.partialorder %v223, inf
          %v227 = vsel %vm226, %v223, %v225
          %vm228 = vcmp.eq.f32.partialorder %v223, 0.0
          %v229 = vand.u32 %v223, 2147483648
          %v230 = vsel %vm228, %v229, %v227
          %231 = vst.msk [vmem:[%s187] sm:$0xff] %vm202, %v230
        $region36: #{tpu_custom_call.1} parent=23 // pred_fallthru
          _
        %p232 = scmp.lt.s32.totalorder %s21, 1
        %s233 = scalar_select %p232, %s21, 1
        %s234 = smul.addr %s233, 8
        %s235 = scalar_lea.vmem %s1, %s234
        %p236 = scmp.lt.s32.totalorder %s21, 1
        %s237 = scalar_select %p236, %s21, 1
        %s238 = smul.addr %s237, 8
        %s239 = scalar_lea.vmem %s2, %s238
        // Predicated region
        $region37: #{tpu_custom_call.1} parent=23 // pred_check
          %p240 = pneg %p75
        $region38: #{tpu_custom_call.1} parent=23 // pred_check_branch
          %242 = sbr.rel (%p240) target = $region40
        $region39: #{tpu_custom_call.1} parent=23 // pred_region
          _
        $region40: #{tpu_custom_call.1} parent=23 // pred_fallthru
          _
        // Predicated region
        $region41: #{tpu_custom_call.1} parent=23 // pred_check
          %p243 = pneg %p101
        $region42: #{tpu_custom_call.1} parent=23 // pred_check_branch
          %245 = sbr.rel (%p243) target = $region44
        $region43: #{tpu_custom_call.1} parent=23 // pred_region
          _
        $region44: #{tpu_custom_call.1} parent=23 // pred_fallthru
          _
      $region24: #{tpu_custom_call.1} parent=5 // pred_fallthru
        _
      %p246 = scmp.le.s32.totalorder 2, %s12
      // Predicated region
      $region45: #{tpu_custom_call.1} parent=5 // pred_check
        %p247 = pneg %p246
      $region46: #{tpu_custom_call.1} parent=5 // pred_check_branch
        %249 = sbr.rel (%p247) target = $region48
      $region47: #{tpu_custom_call.1} parent=5 // pred_region
        %s250 = ssub.s32 %s12, 2
        // Predicated region
        $region49: #{tpu_custom_call.1} parent=47 // pred_check
          %p251 = pneg %p81
        $region50: #{tpu_custom_call.1} parent=47 // pred_check_branch
          %253 = sbr.rel (%p251) target = $region52
        $region51: #{tpu_custom_call.1} parent=47 // pred_region
          %p254 = scmp.lt.s32.totalorder %s23, 1
          %s255 = scalar_select %p254, %s23, 1
          %s256 = smul.addr %s255, 8
          %s257 = scalar_lea.vmem %s1, %s256
        $region52: #{tpu_custom_call.1} parent=47 // pred_fallthru
          _
        // Predicated region
        $region53: #{tpu_custom_call.1} parent=47 // pred_check
          %p258 = pneg %p107
        $region54: #{tpu_custom_call.1} parent=47 // pred_check_branch
          %260 = sbr.rel (%p258) target = $region56
        $region55: #{tpu_custom_call.1} parent=47 // pred_region
          %p261 = scmp.lt.s32.totalorder %s23, 1
          %s262 = scalar_select %p261, %s23, 1
          %s263 = smul.addr %s262, 8
          %s264 = scalar_lea.vmem %s2, %s263
        $region56: #{tpu_custom_call.1} parent=47 // pred_fallthru
          _
      $region48: #{tpu_custom_call.1} parent=5 // pred_fallthru
        _
    $region6: #{tpu_custom_call.1} parent=1 // loop_footer
      %s16 = sadd.s32 1, %s12
    $region7: #{tpu_custom_call.1} parent=1 // loop_footer_branch
      %11 = sbr.rel target = $region3
    $region8: #{tpu_custom_call.1} parent=1 // loop_exit
      _
    %265 = vsyncpa [#allocation5], 1
    %s266 = scalar_lea.sflag [#allocation5], 1
    %267 = vsyncpa %s266, 1

</llo_original>
